<compile_context>
chip_gen: v5e
topology: v5e:2x2
jax: 0.10.0
libtpu: 0.0.40
codegen_flags: <defaults>
</compile_context>

<pallas_src>
import functools

import jax
import jax.numpy as jnp
from jax.experimental import pallas as pl
from jax.experimental.pallas import tpu as pltpu


def _round_up(n, m):
    return ((n + m - 1) // m) * m


def _sigmoid_eup(z):
    # 1 / (1 + exp(-z)); exp -> EUP, approx reciprocal -> EUP. Input/output f32.
    return pl.reciprocal(1.0 + jnp.exp(-z), approx=True)


def autoencoder_kernel(x_ref, w1_ref, b1_ref, w2_ref, b2_ref, o_ref):
    # hidden = sigmoid(x @ W1 + b1)   -- bf16 operands, f32 accumulate
    h = jnp.dot(x_ref[...], w1_ref[...], preferred_element_type=jnp.float32)
    h = _sigmoid_eup(h + b1_ref[...])                  # (TB, K) + (1, K) broadcast, f32
    # out = sigmoid(h @ W2 + b2)
    out = jnp.dot(h.astype(w2_ref.dtype), w2_ref[...],
                  preferred_element_type=jnp.float32)
    o_ref[...] = _sigmoid_eup(out + b2_ref[...]).astype(o_ref.dtype)


@functools.partial(jax.jit, static_argnames=("tb",))
def autoencoder_forward(x, w1_t, b1, w2_t, b2, *, tb=None):
    """Forward pass.

    x:    (B, Q) f32 user vectors
    w1_t: (Q, K)  -- g.weight pre-transposed
    b1:   (K,)
    w2_t: (K, Q)  -- h.weight pre-transposed
    b2:   (Q,)
    returns (B, Q) f32
    """
    B, Q = x.shape
    K = w1_t.shape[1]

    # Batch tile: largest "reasonable" multiple of 8 that keeps VMEM bounded on all gens
    # (cap at 256 rows -> x/out tiles well under v7x's 64 MiB even with double-buffering).
    if tb is None:
        tb = min(256, _round_up(B, 8))
    B_pad = _round_up(B, tb)
    if B_pad != B:
        x = jnp.pad(x, ((0, B_pad - B), (0, 0)))

    # bf16 operands for the MXU, f32 biases / accumulation / elementwise.
    x_bf = x.astype(jnp.bfloat16)
    w1_bf = w1_t.astype(jnp.bfloat16)
    w2_bf = w2_t.astype(jnp.bfloat16)
    b1_2d = b1.reshape(1, K).astype(jnp.float32)
    b2_2d = b2.reshape(1, Q).astype(jnp.float32)

    grid = (B_pad // tb,)

    # Rough VMEM budget: double-buffered x (bf16) + out (f32) tiles, resident weights/biases,
    # plus generous headroom -- still well under v7x's 64 MiB physical VMEM.
    vmem_bytes = (
        2 * tb * Q * 2          # x tile, bf16, double-buffered
        + 2 * tb * Q * 4        # out tile, f32, double-buffered
        + 2 * (Q * K + K * Q) * 2   # weights, bf16
        + 2 * (K + Q) * 4           # biases, f32
    )
    vmem_limit = int(min(48 * 1024 * 1024, max(4 * vmem_bytes, 8 * 1024 * 1024)))

    cost = pl.CostEstimate(
        flops=2 * B_pad * Q * K + 2 * B_pad * K * Q,
        transcendentals=B_pad * (K + Q),          # exp per hidden/output element
        bytes_accessed=(B_pad * Q * 2             # x (bf16)
                        + Q * K * 2 + K * Q * 2   # weights (bf16)
                        + (K + Q) * 4             # biases
                        + B_pad * Q * 4),         # output (f32)
    )

    out = pl.pallas_call(
        autoencoder_kernel,
        out_shape=jax.ShapeDtypeStruct((B_pad, Q), jnp.float32),
        grid=grid,
        in_specs=[
            pl.BlockSpec((tb, Q), lambda i: (i, 0)),   # x: tiled over batch
            pl.BlockSpec((Q, K), lambda i: (0, 0)),    # W1: VMEM-resident
            pl.BlockSpec((1, K), lambda i: (0, 0)),    # b1
            pl.BlockSpec((K, Q), lambda i: (0, 0)),    # W2: VMEM-resident
            pl.BlockSpec((1, Q), lambda i: (0, 0)),    # b2
        ],
        out_specs=pl.BlockSpec((tb, Q), lambda i: (i, 0)),
        compiler_params=pltpu.CompilerParams(
            dimension_semantics=("parallel",),
            vmem_limit_bytes=vmem_limit,
        ),
        cost_estimate=cost,
    )(x_bf, w1_bf, b1_2d, w2_bf, b2_2d)

    return out[:B] if B_pad != B else out


def init_params(key, num_question, k):
    """Deterministic init mirroring nn.Linear's uniform(-1/sqrt(fan_in), 1/sqrt(fan_in))."""
    k1, k2, k3, k4 = jax.random.split(key, 4)
    bound_g = 1.0 / jnp.sqrt(num_question)
    bound_h = 1.0 / jnp.sqrt(k)
    # stored pre-transposed: (in, out)
    w1_t = jax.random.uniform(k1, (num_question, k), jnp.float32, -bound_g, bound_g)
    b1 = jax.random.uniform(k2, (k,), jnp.float32, -bound_g, bound_g)
    w2_t = jax.random.uniform(k3, (k, num_question), jnp.float32, -bound_h, bound_h)
    b2 = jax.random.uniform(k4, (num_question,), jnp.float32, -bound_h, bound_h)
    return w1_t, b1, w2_t, b2


def _reference(x, w1_t, b1, w2_t, b2):
    # Same numerics as the kernel's intent: bf16 operands, f32 math.
    xb = x.astype(jnp.bfloat16).astype(jnp.float32)
    w1 = w1_t.astype(jnp.bfloat16).astype(jnp.float32)
    w2 = w2_t.astype(jnp.bfloat16).astype(jnp.float32)
    h = jax.nn.sigmoid(xb @ w1 + b1)
    return jax.nn.sigmoid(h @ w2 + b2)


if __name__ == "__main__":
    num_question = 256
    k = 128

    key = jax.random.PRNGKey(0)
    kx, kp, kx2 = jax.random.split(key, 3)
    w1_t, b1, w2_t, b2 = init_params(kp, num_question, k)

    # Small case (single batch tile).
    x_small = jax.random.uniform(kx, (8, num_question), jnp.float32)
    out_small = jax.block_until_ready(autoencoder_forward(x_small, w1_t, b1, w2_t, b2))
    ref_small = _reference(x_small, w1_t, b1, w2_t, b2)
    assert out_small.shape == (8, num_question)
    assert jnp.allclose(out_small, ref_small, atol=1e-2, rtol=1e-2)

    # Larger, non-tile-multiple batch: exercises batch tiling (TB=256) + padding path.
    x_big = jax.random.uniform(kx2, (300, num_question), jnp.float32)
    out_big = jax.block_until_ready(autoencoder_forward(x_big, w1_t, b1, w2_t, b2))
    ref_big = _reference(x_big, w1_t, b1, w2_t, b2)
    assert out_big.shape == (300, num_question)
    assert jnp.allclose(out_big, ref_big, atol=1e-2, rtol=1e-2)

    print("KERNEL_OK")
</pallas_src>

<mosaic_0001>
module attributes {stable_mosaic.version = 11 : i64} {
  func.func @autoencoder_kernel(%arg0: i32, %arg1: memref<8x256xbf16, #tpu.memory_space<vmem>>, %arg2: memref<256x128xbf16, #tpu.memory_space<vmem>>, %arg3: memref<1x128xf32, #tpu.memory_space<vmem>>, %arg4: memref<128x256xbf16, #tpu.memory_space<vmem>>, %arg5: memref<1x256xf32, #tpu.memory_space<vmem>>, %arg6: memref<8x256xf32, #tpu.memory_space<vmem>>) attributes {dimension_semantics = [#tpu.dimension_semantics<parallel>], iteration_bounds = array<i64: 1>, scalar_prefetch = 0 : i64, scratch_operands = 0 : i64, tpu.core_type = #tpu.core_type<tc>, window_params = [{transform_indices = @transform_0, window_bounds = array<i64: 8, 256>}, {pipeline_mode = #tpu.pipeline_mode<synchronous>, transform_indices = @transform_1, window_bounds = array<i64: 256, 128>}, {pipeline_mode = #tpu.pipeline_mode<synchronous>, transform_indices = @transform_2, window_bounds = array<i64: 1, 128>}, {pipeline_mode = #tpu.pipeline_mode<synchronous>, transform_indices = @transform_3, window_bounds = array<i64: 128, 256>}, {pipeline_mode = #tpu.pipeline_mode<synchronous>, transform_indices = @transform_4, window_bounds = array<i64: 1, 256>}, {transform_indices = @transform_5, window_bounds = array<i64: 8, 256>}]} {
    %c0 = arith.constant 0 : index
    %c0_0 = arith.constant 0 : index
    %0 = vector.load %arg1[%c0, %c0_0] : memref<8x256xbf16, #tpu.memory_space<vmem>>, vector<8x256xbf16>
    %c0_1 = arith.constant 0 : index
    %c0_2 = arith.constant 0 : index
    %1 = vector.load %arg2[%c0_1, %c0_2] : memref<256x128xbf16, #tpu.memory_space<vmem>>, vector<256x128xbf16>
    %cst = arith.constant dense<0.000000e+00> : vector<8x128xf32>
    %2 = tpu.matmul %0, %1, %cst {dimension_numbers = #tpu.dot_dimension_numbers<[1], [0], [0], [1], [0, 0, 1, 1], [], []>} : vector<8x256xbf16>, vector<256x128xbf16>, vector<8x128xf32> -> vector<8x128xf32>
    %c0_3 = arith.constant 0 : index
    %c0_4 = arith.constant 0 : index
    %3 = vector.load %arg3[%c0_3, %c0_4] : memref<1x128xf32, #tpu.memory_space<vmem>>, vector<1x128xf32>
    %4 = vector.broadcast %3 : vector<1x128xf32> to vector<8x128xf32>
    %5 = arith.addf %2, %4 : vector<8x128xf32>
    %cst_5 = arith.constant 0.000000e+00 : f32
    %6 = vector.broadcast %cst_5 : f32 to vector<8x128xf32>
    %7 = arith.subf %6, %5 : vector<8x128xf32>
    %8 = math.exp %7 : vector<8x128xf32>
    %cst_6 = arith.constant 1.000000e+00 : f32
    %9 = vector.broadcast %cst_6 : f32 to vector<8x128xf32>
    %10 = arith.addf %9, %8 : vector<8x128xf32>
    %11 = tpu.reciprocal %10 {approx = true} : vector<8x128xf32> -> vector<8x128xf32>
    %12 = arith.truncf %11 : vector<8x128xf32> to vector<8x128xbf16>
    %c0_7 = arith.constant 0 : index
    %c0_8 = arith.constant 0 : index
    %13 = vector.load %arg4[%c0_7, %c0_8] : memref<128x256xbf16, #tpu.memory_space<vmem>>, vector<128x256xbf16>
    %cst_9 = arith.constant dense<0.000000e+00> : vector<8x256xf32>
    %14 = tpu.matmul %12, %13, %cst_9 {dimension_numbers = #tpu.dot_dimension_numbers<[1], [0], [0], [1], [0, 0, 1, 1], [], []>} : vector<8x128xbf16>, vector<128x256xbf16>, vector<8x256xf32> -> vector<8x256xf32>
    %c0_10 = arith.constant 0 : index
    %c0_11 = arith.constant 0 : index
    %15 = vector.load %arg5[%c0_10, %c0_11] : memref<1x256xf32, #tpu.memory_space<vmem>>, vector<1x256xf32>
    %16 = vector.broadcast %15 : vector<1x256xf32> to vector<8x256xf32>
    %17 = arith.addf %14, %16 : vector<8x256xf32>
    %cst_12 = arith.constant 0.000000e+00 : f32
    %18 = vector.broadcast %cst_12 : f32 to vector<8x256xf32>
    %19 = arith.subf %18, %17 : vector<8x256xf32>
    %20 = math.exp %19 : vector<8x256xf32>
    %cst_13 = arith.constant 1.000000e+00 : f32
    %21 = vector.broadcast %cst_13 : f32 to vector<8x256xf32>
    %22 = arith.addf %21, %20 : vector<8x256xf32>
    %23 = tpu.reciprocal %22 {approx = true} : vector<8x256xf32> -> vector<8x256xf32>
    %c0_14 = arith.constant 0 : index
    %c0_15 = arith.constant 0 : index
    %24 = vector.load %arg6[%c0_14, %c0_15] : memref<8x256xf32, #tpu.memory_space<vmem>>, vector<8x256xf32>
    tpu.vector_store %arg6[%c0_14, %c0_15], %23 {strides = array<i32>} : memref<8x256xf32, #tpu.memory_space<vmem>>, vector<8x256xf32>,
    return
  }
  func.func @transform_0(%arg0: i32) -> (i32, i32) {
    %c0_i32 = arith.constant 0 : i32
    %c0_i32_0 = arith.constant 0 : i32
    return %arg0, %c0_i32 : i32, i32
  }
  func.func @transform_1(%arg0: i32) -> (i32, i32) {
    %c0_i32 = arith.constant 0 : i32
    %c0_i32_0 = arith.constant 0 : i32
    %c0_i32_1 = arith.constant 0 : i32
    return %c0_i32, %c0_i32_0 : i32, i32
  }
  func.func @transform_2(%arg0: i32) -> (i32, i32) {
    %c0_i32 = arith.constant 0 : i32
    %c0_i32_0 = arith.constant 0 : i32
    %c0_i32_1 = arith.constant 0 : i32
    return %c0_i32, %c0_i32_0 : i32, i32
  }
  func.func @transform_3(%arg0: i32) -> (i32, i32) {
    %c0_i32 = arith.constant 0 : i32
    %c0_i32_0 = arith.constant 0 : i32
    %c0_i32_1 = arith.constant 0 : i32
    return %c0_i32, %c0_i32_0 : i32, i32
  }
  func.func @transform_4(%arg0: i32) -> (i32, i32) {
    %c0_i32 = arith.constant 0 : i32
    %c0_i32_0 = arith.constant 0 : i32
    %c0_i32_1 = arith.constant 0 : i32
    return %c0_i32, %c0_i32_0 : i32, i32
  }
  func.func @transform_5(%arg0: i32) -> (i32, i32) {
    %c0_i32 = arith.constant 0 : i32
    %c0_i32_0 = arith.constant 0 : i32
    return %arg0, %c0_i32 : i32, i32
  }
}

</mosaic_0001>

<llo_original>
// kernel: autoencoder_forward.1
$region0: #{autoencoder_forward.1}
  #allocation0 [shape = 'u32[]', space=smem, size = 0x4, offset = 0x4, fixed_abs, tag = 'smem constant byte address 0x4 - core index']
  #allocation1 [shape = 'u32[72,128]{1,0:T(1,128)}', space=vmem, size = 0x9000, scoped, tag = 'internal scratch']
  %s0 = inlined_call_operand.vmem [shape: bf16[8,256], index: 0, kind: input, shape index: {}]
  %s1 = inlined_call_operand.vmem [shape: bf16[256,128], index: 1, kind: input, shape index: {}]
  %s2 = inlined_call_operand.vmem [shape: f32[1,128], index: 2, kind: input, shape index: {}]
  %s3 = inlined_call_operand.vmem [shape: bf16[128,256], index: 3, kind: input, shape index: {}]
  %s4 = inlined_call_operand.vmem [shape: f32[1,256], index: 4, kind: input, shape index: {}]
  %s5 = inlined_call_operand.hbm [shape: f32[8,256], index: 5, kind: output, shape index: {}]
  %s6 = sld [smem:[#allocation0]]
  $region30: #{autoencoder_forward.1} parent=0
    _
  %s8 = ssub.s32 1, %s6
  %s9 = scalar_select 0, %s8, %s6
  $region1: #{autoencoder_forward.1} parent=0
    #allocation2 [shape = 'u8[8192]{0}', space=vmem, size = 0x2000, scoped, tag = 'output window, operand 0, single buffered']
    #allocation3 [shape = 's32[1]{0}', space=sflag, size = 0x4, scoped, tag = 'scoped memory for autoencoder_forward.1']
    %10 = vsyncpa [#allocation3], 0
    // Predicated region
    $region2: #{autoencoder_forward.1} parent=1 // pred_check
      _
    $region3: #{autoencoder_forward.1} parent=1 // pred_check_branch
      %12 = sbr.rel (0) target = $region5
    $region4: #{autoencoder_forward.1} parent=1 // pred_region
      _
    $region5: #{autoencoder_forward.1} parent=1 // pred_fallthru
      _
    // Predicated region
    $region6: #{autoencoder_forward.1} parent=1 // pred_check
      _
    $region7: #{autoencoder_forward.1} parent=1 // pred_check_branch
      %14 = sbr.rel (0) target = $region9
    $region8: #{autoencoder_forward.1} parent=1 // pred_region
      _
    $region9: #{autoencoder_forward.1} parent=1 // pred_fallthru
      _
    // Predicated region
    $region10: #{autoencoder_forward.1} parent=1 // pred_check
      _
    $region11: #{autoencoder_forward.1} parent=1 // pred_check_branch
      %16 = sbr.rel (0) target = $region13
    $region12: #{autoencoder_forward.1} parent=1 // pred_region
      _
    $region13: #{autoencoder_forward.1} parent=1 // pred_fallthru
      _
    // Predicated region
    $region14: #{autoencoder_forward.1} parent=1 // pred_check
      _
    $region15: #{autoencoder_forward.1} parent=1 // pred_check_branch
      %18 = sbr.rel (0) target = $region17
    $region16: #{autoencoder_forward.1} parent=1 // pred_region
      _
    $region17: #{autoencoder_forward.1} parent=1 // pred_fallthru
      _
    // Predicated region
    $region18: #{autoencoder_forward.1} parent=1 // pred_check
      _
    $region19: #{autoencoder_forward.1} parent=1 // pred_check_branch
      %20 = sbr.rel (0) target = $region21
    $region20: #{autoencoder_forward.1} parent=1 // pred_region
      _
    $region21: #{autoencoder_forward.1} parent=1 // pred_fallthru
      _
    %v21 = vld [vmem:[%s0] sm:$0xff]
    %v22 = vld [vmem:[%s1] sm:$0xf]
    %v23 = vld [vmem:[%s1 + $0x4] sm:$0xf]
    %v24 = vld [vmem:[%s1 + $0x8] sm:$0xf]
    %v25 = vld [vmem:[%s1 + $0xc] sm:$0xf]
    %v26 = vld [vmem:[%s1 + $0x10] sm:$0xf]
    %v27 = vld [vmem:[%s1 + $0x14] sm:$0xf]
    %v28 = vld [vmem:[%s1 + $0x18] sm:$0xf]
    %v29 = vld [vmem:[%s1 + $0x1c] sm:$0xf]
    %v30 = vld [vmem:[%s1 + $0x20] sm:$0xf]
    %v31 = vld [vmem:[%s1 + $0x24] sm:$0xf]
    %v32 = vld [vmem:[%s1 + $0x28] sm:$0xf]
    %v33 = vld [vmem:[%s1 + $0x2c] sm:$0xf]
    %v34 = vld [vmem:[%s1 + $0x30] sm:$0xf]
    %v35 = vld [vmem:[%s1 + $0x34] sm:$0xf]
    %v36 = vld [vmem:[%s1 + $0x38] sm:$0xf]
    %v37 = vld [vmem:[%s1 + $0x3c] sm:$0xf]
    %v38 = vld [vmem:[%s1 + $0x40] sm:$0xf]
    %v39 = vld [vmem:[%s1 + $0x44] sm:$0xf]
    %v40 = vld [vmem:[%s1 + $0x48] sm:$0xf]
    %v41 = vld [vmem:[%s1 + $0x4c] sm:$0xf]
    %v42 = vld [vmem:[%s1 + $0x50] sm:$0xf]
    %v43 = vld [vmem:[%s1 + $0x54] sm:$0xf]
    %v44 = vld [vmem:[%s1 + $0x58] sm:$0xf]
    %v45 = vld [vmem:[%s1 + $0x5c] sm:$0xf]
    %v46 = vld [vmem:[%s1 + $0x60] sm:$0xf]
    %v47 = vld [vmem:[%s1 + $0x64] sm:$0xf]
    %v48 = vld [vmem:[%s1 + $0x68] sm:$0xf]
    %v49 = vld [vmem:[%s1 + $0x6c] sm:$0xf]
    %v50 = vld [vmem:[%s1 + $0x70] sm:$0xf]
    %v51 = vld [vmem:[%s1 + $0x74] sm:$0xf]
    %v52 = vld [vmem:[%s1 + $0x78] sm:$0xf]
    %v53 = vld [vmem:[%s1 + $0x7c] sm:$0xf]
    %v54 = vld [vmem:[%s2] sm:$0x1]
    %v56 = vperm.slane %v54, 0
    %v59 = vunpack.c.l.b16 %v21
    %v60 = vunpack.c.h.b16 %v21
    %v61 = vpack.c.b16 %v59, %v59
    %v62 = vpack.c.b16 %v60, %v60
    %v97 = vunpack.c.l.b16 %v22
    %v98 = vunpack.c.l.b16 %v23
    %v99 = vunpack.c.l.b16 %v24
    %v100 = vunpack.c.l.b16 %v25
    %v101 = vunpack.c.l.b16 %v26
    %v102 = vunpack.c.l.b16 %v27
    %v103 = vunpack.c.l.b16 %v28
    %v104 = vunpack.c.l.b16 %v29
    %v105 = vunpack.c.l.b16 %v30
    %v106 = vunpack.c.l.b16 %v31
    %v107 = vunpack.c.l.b16 %v32
    %v108 = vunpack.c.l.b16 %v33
    %v109 = vunpack.c.l.b16 %v34
    %v110 = vunpack.c.l.b16 %v35
    %v111 = vunpack.c.l.b16 %v36
    %v112 = vunpack.c.l.b16 %v37
    %v113 = vunpack.c.l.b16 %v38
    %v114 = vunpack.c.l.b16 %v39
    %v115 = vunpack.c.l.b16 %v40
    %v116 = vunpack.c.l.b16 %v41
    %v117 = vunpack.c.l.b16 %v42
    %v118 = vunpack.c.l.b16 %v43
    %v119 = vunpack.c.l.b16 %v44
    %v120 = vunpack.c.l.b16 %v45
    %v121 = vunpack.c.l.b16 %v46
    %v122 = vunpack.c.l.b16 %v47
    %v123 = vunpack.c.l.b16 %v48
    %v124 = vunpack.c.l.b16 %v49
    %v125 = vunpack.c.l.b16 %v50
    %v126 = vunpack.c.l.b16 %v51
    %v127 = vunpack.c.l.b16 %v52
    %v128 = vunpack.c.l.b16 %v53
    %v129 = vpack.c.b16 %v98, %v97
    %v130 = vpack.c.b16 %v100, %v99
    %v131 = vpack.c.b16 %v102, %v101
    %v132 = vpack.c.b16 %v104, %v103
    %v133 = vpack.c.b16 %v106, %v105
    %v134 = vpack.c.b16 %v108, %v107
    %v135 = vpack.c.b16 %v110, %v109
    %v136 = vpack.c.b16 %v112, %v111
    %v137 = vpack.c.b16 %v114, %v113
    %v138 = vpack.c.b16 %v116, %v115
    %v139 = vpack.c.b16 %v118, %v117
    %v140 = vpack.c.b16 %v120, %v119
    %v141 = vpack.c.b16 %v122, %v121
    %v142 = vpack.c.b16 %v124, %v123
    %v143 = vpack.c.b16 %v126, %v125
    %v144 = vpack.c.b16 %v128, %v127
    %161 = vmatpush.bf16.msra.mxu0 %v136
    %162 = vmatpush.bf16.msra.mxu0 %v135
    %163 = vmatpush.bf16.msra.mxu0 %v134
    %164 = vmatpush.bf16.msra.mxu0 %v133
    %165 = vmatpush.bf16.msra.mxu0 %v132
    %166 = vmatpush.bf16.msra.mxu0 %v131
    %167 = vmatpush.bf16.msra.mxu0 %v130
    %168 = vmatpush.bf16.msra.mxu0 %v129
    %169 = vmatmul.bf16.gmra.mxu0 %v61
    %v170 = vpop.f32.mrf.mxu0
    %v171 = vadd.f32 %v56, %v170
    %v172 = vpop.f32.mrf.mxu0
    %173 = vdwg.mxu0
    %174 = vmatpush.bf16.msra.mxu0 %v144
    %175 = vmatpush.bf16.msra.mxu0 %v143
    %176 = vmatpush.bf16.msra.mxu0 %v142
    %177 = vmatpush.bf16.msra.mxu0 %v141
    %178 = vmatpush.bf16.msra.mxu0 %v140
    %179 = vmatpush.bf16.msra.mxu0 %v139
    %180 = vmatpush.bf16.msra.mxu0 %v138
    %181 = vmatpush.bf16.msra.mxu0 %v137
    %182 = vmatmul.bf16.gmra.mxu0 %v62
    %v183 = vpop.f32.mrf.mxu0
    %v184 = vadd.f32 %v171, %v183
    %v185 = vpop.f32.mrf.mxu0
    %186 = vdwg.mxu0
    %v187 = vsub.f32 0.0, %v184
    %v188 = vmul.f32 %v187, 1.442695
    %v189 = vpow.pop %v188
    %v190 = vadd.f32 %v189, 1.0
    %v191 = vrcp.pop %v190
    %v192 = vpack.c.bf16 %v191, %v191
    %v193 = vld [vmem:[%s3] sm:$0xff]
    %v194 = vld [vmem:[%s3 + $0x8] sm:$0xff]
    %v195 = vld [vmem:[%s3 + $0x10] sm:$0xff]
    %v196 = vld [vmem:[%s3 + $0x18] sm:$0xff]
    %v197 = vld [vmem:[%s3 + $0x20] sm:$0xff]
    %v198 = vld [vmem:[%s3 + $0x28] sm:$0xff]
    %v199 = vld [vmem:[%s3 + $0x30] sm:$0xff]
    %v200 = vld [vmem:[%s3 + $0x38] sm:$0xff]
    %v201 = vld [vmem:[%s3 + $0x40] sm:$0xff]
    %v202 = vld [vmem:[%s3 + $0x48] sm:$0xff]
    %v203 = vld [vmem:[%s3 + $0x50] sm:$0xff]
    %v204 = vld [vmem:[%s3 + $0x58] sm:$0xff]
    %v205 = vld [vmem:[%s3 + $0x60] sm:$0xff]
    %v206 = vld [vmem:[%s3 + $0x68] sm:$0xff]
    %v207 = vld [vmem:[%s3 + $0x70] sm:$0xff]
    %v208 = vld [vmem:[%s3 + $0x78] sm:$0xff]
    %v209 = vld [vmem:[%s4] sm:$0x3]
    %v211 = vperm.slane %v209, 0
    %v212 = vperm.slane %v209, 1
    %v231 = vunpack.c.l.b16 %v193
    %v232 = vunpack.c.h.b16 %v193
    %v233 = vunpack.c.l.b16 %v194
    %v234 = vunpack.c.h.b16 %v194
    %v235 = vunpack.c.l.b16 %v195
    %v236 = vunpack.c.h.b16 %v195
    %v237 = vunpack.c.l.b16 %v196
    %v238 = vunpack.c.h.b16 %v196
    %v239 = vunpack.c.l.b16 %v197
    %v240 = vunpack.c.h.b16 %v197
    %v241 = vunpack.c.l.b16 %v198
    %v242 = vunpack.c.h.b16 %v198
    %v243 = vunpack.c.l.b16 %v199
    %v244 = vunpack.c.h.b16 %v199
    %v245 = vunpack.c.l.b16 %v200
    %v246 = vunpack.c.h.b16 %v200
    %v247 = vunpack.c.l.b16 %v201
    %v248 = vunpack.c.h.b16 %v201
    %v249 = vunpack.c.l.b16 %v202
    %v250 = vunpack.c.h.b16 %v202
    %v251 = vunpack.c.l.b16 %v203
    %v252 = vunpack.c.h.b16 %v203
    %v253 = vunpack.c.l.b16 %v204
    %v254 = vunpack.c.h.b16 %v204
    %v255 = vunpack.c.l.b16 %v205
    %v256 = vunpack.c.h.b16 %v205
    %v257 = vunpack.c.l.b16 %v206
    %v258 = vunpack.c.h.b16 %v206
    %v259 = vunpack.c.l.b16 %v207
    %v260 = vunpack.c.h.b16 %v207
    %v261 = vunpack.c.l.b16 %v208
    %v262 = vunpack.c.h.b16 %v208
    %v263 = vpack.c.b16 %v233, %v231
    %v264 = vpack.c.b16 %v234, %v232
    %v265 = vpack.c.b16 %v237, %v235
    %v266 = vpack.c.b16 %v238, %v236
    %v267 = vpack.c.b16 %v241, %v239
    %v268 = vpack.c.b16 %v242, %v240
    %v269 = vpack.c.b16 %v245, %v243
    %v270 = vpack.c.b16 %v246, %v244
    %v271 = vpack.c.b16 %v249, %v247
    %v272 = vpack.c.b16 %v250, %v248
    %v273 = vpack.c.b16 %v253, %v251
    %v274 = vpack.c.b16 %v254, %v252
    %v275 = vpack.c.b16 %v257, %v255
    %v276 = vpack.c.b16 %v258, %v256
    %v277 = vpack.c.b16 %v261, %v259
    %v278 = vpack.c.b16 %v262, %v260
    %295 = vmatpush.bf16.msra.mxu0 %v277
    %296 = vmatpush.bf16.msra.mxu0 %v275
    %297 = vmatpush.bf16.msra.mxu0 %v273
    %298 = vmatpush.bf16.msra.mxu0 %v271
    %299 = vmatpush.bf16.msra.mxu0 %v269
    %300 = vmatpush.bf16.msra.mxu0 %v267
    %301 = vmatpush.bf16.msra.mxu0 %v265
    %302 = vmatpush.bf16.msra.mxu0 %v263
    %303 = vmatmul.bf16.gmra.mxu0 %v192
    %v304 = vpop.f32.mrf.mxu0
    %v305 = vadd.f32 %v211, %v304
    %v306 = vpop.f32.mrf.mxu0
    %307 = vdwg.mxu0
    %308 = vmatpush.bf16.msra.mxu0 %v278
    %309 = vmatpush.bf16.msra.mxu0 %v276
    %310 = vmatpush.bf16.msra.mxu0 %v274
    %311 = vmatpush.bf16.msra.mxu0 %v272
    %312 = vmatpush.bf16.msra.mxu0 %v270
    %313 = vmatpush.bf16.msra.mxu0 %v268
    %314 = vmatpush.bf16.msra.mxu0 %v266
    %315 = vmatpush.bf16.msra.mxu0 %v264
    %316 = vmatmul.bf16.gmra.mxu0 %v192
    %v317 = vpop.f32.mrf.mxu0
    %v318 = vadd.f32 %v212, %v317
    %v319 = vpop.f32.mrf.mxu0
    %320 = vdwg.mxu0
    %v321 = vsub.f32 0.0, %v305
    %v322 = vsub.f32 0.0, %v318
    %v323 = vmul.f32 %v321, 1.442695
    %v324 = vpow.pop %v323
    %v325 = vmul.f32 %v322, 1.442695
    %v326 = vpow.pop %v325
    %v327 = vadd.f32 %v324, 1.0
    %v328 = vadd.f32 %v326, 1.0
    %v329 = vrcp.pop %v327
    %v330 = vrcp.pop %v328
    %331 = vst [vmem:[#allocation2] sm:$0xff] %v329
    %332 = vst [vmem:[#allocation2 + $0x8] sm:$0xff] %v330
    // Predicated region
    $region22: #{autoencoder_forward.1} parent=1 // pred_check
      _
    $region23: #{autoencoder_forward.1} parent=1 // pred_check_branch
      %334 = sbr.rel (0) target = $region25
    $region24: #{autoencoder_forward.1} parent=1 // pred_region
      %336 = vsyncadd [#allocation3], 0
      %s338 = sshll.u32 [#allocation2], 4
      %s339 = int_to_ptr.vmem [resolvable:$true] %s338
      %s340 = sshll.u32 %s5, 4
      %s341 = int_to_ptr.hbm [resolvable:$true] %s340
      %343 = dma.vmem_to_hbm [thread:$0]  %s339, 256, %s341, [#allocation3]
    $region25: #{autoencoder_forward.1} parent=1 // pred_fallthru
      _
    // Predicated region
    $region26: #{autoencoder_forward.1} parent=1 // pred_check
      _
    $region27: #{autoencoder_forward.1} parent=1 // pred_check_branch
      %345 = sbr.rel (0) target = $region29
    $region28: #{autoencoder_forward.1} parent=1 // pred_region
      %347 = dma.done [#allocation3], 256
    $region29: #{autoencoder_forward.1} parent=1 // pred_fallthru
      _
    %348 = vsyncpa [#allocation3], 1

</llo_original>
